<compile_context>
chip_gen: v7x
topology: tpu7x:2x2x1
jax: 0.10.0
libtpu: 0.0.40
codegen_flags: <defaults>
</compile_context>

<pallas_src>
import functools

import jax
import jax.numpy as jnp
from jax import lax
from jax.experimental import pallas as pl
from jax.experimental.pallas import tpu as pltpu


# ------------------------------ Pallas kernel -------------------------------

def _ntxent_tiled_kernel(inv_t, inv_2n, eps,
                         qi_ref, qj_ref, ki_ref, kj_ref,
                         loss_ref, di_ref, dj_ref):
    """One (row_block, col_block) tile of the 2x2-block NT-Xent computation.

    qi/qj: (BR, D) query-row blocks of emb_i / emb_j (constant over the col
           axis -> fetched once per row block by the pipeline).
    ki/kj: (BC, D) key-column blocks of emb_i / emb_j.
    loss_ref: (1, 1) scalar output, resident across the whole grid.
    di/dj:  (BR, 1) VMEM denominator accumulators for the two halves.
    """
    r = pl.program_id(0)
    c = pl.program_id(1)
    nc = pl.num_programs(1)

    f32 = jnp.float32
    bf16 = jnp.bfloat16
    eps2 = eps * eps

    # ---- load + row L2-normalize (elementwise math kept in f32: v5e VPU has
    # no bf16; rsqrt goes to the EUP slot) ----
    qi = qi_ref[...].astype(f32)
    qj = qj_ref[...].astype(f32)
    ki = ki_ref[...].astype(f32)
    kj = kj_ref[...].astype(f32)

    def row_stats(x):
        ss = jnp.sum(x * x, axis=-1, keepdims=True)          # (rows, 1)
        return ss, lax.rsqrt(jnp.maximum(ss, eps2))           # == 1/max(||x||, eps)

    ss_qi, rqi = row_stats(qi)
    ss_qj, rqj = row_stats(qj)
    _, rki = row_stats(ki)
    _, rkj = row_stats(kj)

    # Fold 1/T into the query-side normalization scale: matmul outputs are
    # already logits (cosine / T), so no per-element divide over the tiles.
    qi_s = qi * (rqi * inv_t)
    qj_s = qj * (rqj * inv_t)
    ki_n = ki * rki
    kj_n = kj * rkj

    # bf16 MXU operands, f32 accumulation.
    qi_b, qj_b = qi_s.astype(bf16), qj_s.astype(bf16)
    ki_b, kj_b = ki_n.astype(bf16), kj_n.astype(bf16)

    dims = (((1,), (1,)), ((), ()))  # contract last dims of both (no k.T copy)

    def logits(a, b):
        return lax.dot_general(a, b, dims, preferred_element_type=f32)

    # Partial denominator row-sums for this column block (both sub-blocks that
    # touch these query rows).  Plain exp is safe: |logit| <= 1/T.
    part_i = (jnp.sum(jnp.exp(logits(qi_b, ki_b)), axis=-1, keepdims=True) +
              jnp.sum(jnp.exp(logits(qi_b, kj_b)), axis=-1, keepdims=True))
    part_j = (jnp.sum(jnp.exp(logits(qj_b, ki_b)), axis=-1, keepdims=True) +
              jnp.sum(jnp.exp(logits(qj_b, kj_b)), axis=-1, keepdims=True))

    @pl.when(c == 0)
    def _():
        di_ref[...] = jnp.zeros_like(di_ref)
        dj_ref[...] = jnp.zeros_like(dj_ref)

    di_ref[...] += part_i
    dj_ref[...] += part_j

    @pl.when((r == 0) & (c == 0))
    def _():
        loss_ref[...] = jnp.zeros_like(loss_ref)

    @pl.when(c == nc - 1)
    def _():
        # Self-exclusion: subtract exp(||z_row||^2 / T).  For unit-norm rows
        # this is exp(1/T); for all-zero rows (F.normalize maps them to the
        # zero vector) ss * rsqrt^2 == 0, so exp(0) is subtracted — matching
        # the reference exactly.  (Accumulated diagonal came from the bf16
        # MXU path; the f32 analytic term differs only by matmul rounding.)
        self_i = jnp.exp(ss_qi * (rqi * rqi) * inv_t)
        self_j = jnp.exp(ss_qj * (rqj * rqj) * inv_t)
        den_i = di_ref[...] - self_i
        den_j = dj_ref[...] - self_j

        # Positive-pair logit: row-wise dot of the two normalized halves,
        # shared by l(k, k+N) and l(k+N, k).  O(BR*D) instead of an O((2N)^2)
        # masked gather.
        pos = jnp.sum(qi * qj, axis=-1, keepdims=True) * (rqi * rqj * inv_t)

        # l(i, pos) = log(denom_i) - pos ;   sum both halves for this block.
        per_row = (jnp.log(den_i) - pos) + (jnp.log(den_j) - pos)   # (BR, 1)
        loss_ref[...] += jnp.sum(per_row, axis=0, keepdims=True) * inv_2n


# --------------------------------- wrapper -----------------------------------

def contrastive_loss_eli5(emb_i, emb_j, temperature=0.5,
                          block_rows=256, block_cols=256):
    """SimCLR NT-Xent loss, fused into one tiled pallas_call."""
    n, d = emb_i.shape
    assert emb_j.shape == (n, d), (emb_i.shape, emb_j.shape)

    br = min(block_rows, n)
    bc = min(block_cols, n)
    assert n % br == 0 and n % bc == 0, "batch must divide the block sizes"
    assert (br % 8 == 0) or (br == n), "row block must be sublane aligned"
    assert (bc % 8 == 0) or (bc == n), "col block must be sublane aligned"

    inv_t = 1.0 / float(temperature)
    inv_2n = 1.0 / float(2 * n)
    grid = (n // br, n // bc)

    kernel = functools.partial(_ntxent_tiled_kernel, inv_t, inv_2n, 1e-12)

    out = pl.pallas_call(
        kernel,
        out_shape=jax.ShapeDtypeStruct((1, 1), jnp.float32),
        grid=grid,
        in_specs=[
            pl.BlockSpec((br, d), lambda r, c: (r, 0)),   # emb_i query rows
            pl.BlockSpec((br, d), lambda r, c: (r, 0)),   # emb_j query rows
            pl.BlockSpec((bc, d), lambda r, c: (c, 0)),   # emb_i key cols
            pl.BlockSpec((bc, d), lambda r, c: (c, 0)),   # emb_j key cols
        ],
        out_specs=pl.BlockSpec((1, 1), lambda r, c: (0, 0)),
        scratch_shapes=[pltpu.VMEM((br, 1), jnp.float32),   # denom half-i
                        pltpu.VMEM((br, 1), jnp.float32)],  # denom half-j
        compiler_params=pltpu.CompilerParams(
            # Scalar output is accumulated across both axes -> both arbitrary.
            dimension_semantics=("arbitrary", "arbitrary")),
    )(emb_i, emb_j, emb_i, emb_j)
    return out[0, 0]


# ---------------------- pure-JAX reference (for checking) --------------------

def reference_loss(emb_i, emb_j, temperature=0.5):
    hi = jax.lax.Precision.HIGHEST

    def norm(x):
        return x / jnp.maximum(
            jnp.linalg.norm(x, axis=1, keepdims=True), 1e-12)

    reps = jnp.concatenate([norm(emb_i), norm(emb_j)], axis=0)
    sim = jnp.matmul(reps, reps.T, precision=hi)

    n = emb_i.shape[0]
    two_n = 2 * n
    exp_sim = jnp.exp(sim / temperature)
    not_self = 1.0 - jnp.eye(two_n, dtype=sim.dtype)
    denom = jnp.sum(not_self * exp_sim, axis=1)

    idx = jnp.arange(two_n)
    pos = sim[idx, (idx + n) % two_n]
    per_row = -jnp.log(jnp.exp(pos / temperature) / denom)
    return jnp.sum(per_row) / two_n


# ---------------------------------- main --------------------------------------

if __name__ == "__main__":
    # ContrastiveLossELI5(batch=8, temperature=0.5); embeddings of width 32.
    N, D = 8, 32
    TEMPERATURE = 0.5

    root = jax.random.PRNGKey(0)
    ki, kj = jax.random.split(root)
    emb_i = jax.random.normal(ki, (N, D), jnp.float32)
    emb_j = jax.random.normal(kj, (N, D), jnp.float32)

    loss = contrastive_loss_eli5(emb_i, emb_j, TEMPERATURE)
    loss = jax.block_until_ready(loss)

    ref = reference_loss(emb_i, emb_j, TEMPERATURE)
    err = float(jnp.abs(loss - ref))
    assert loss.shape == (), loss.shape
    assert err < 2e-2, (
        f"mismatch vs reference: kernel={float(loss)} ref={float(ref)} err={err}")
    print("KERNEL_OK")
</pallas_src>

<mosaic_0001>
module attributes {stable_mosaic.version = 11 : i64} {
  func.func @_ntxent_tiled_kernel(%arg0: i32, %arg1: i32, %arg2: memref<8x32xf32, #tpu.memory_space<vmem>>, %arg3: memref<8x32xf32, #tpu.memory_space<vmem>>, %arg4: memref<8x32xf32, #tpu.memory_space<vmem>>, %arg5: memref<8x32xf32, #tpu.memory_space<vmem>>, %arg6: memref<1x1xf32, #tpu.memory_space<vmem>>, %arg7: memref<8x1xf32, #tpu.memory_space<vmem>>, %arg8: memref<8x1xf32, #tpu.memory_space<vmem>>) attributes {dimension_semantics = [#tpu.dimension_semantics<arbitrary>, #tpu.dimension_semantics<arbitrary>], iteration_bounds = array<i64: 1, 1>, scalar_prefetch = 0 : i64, scratch_operands = 2 : i64, tpu.core_type = #tpu.core_type<tc>, window_params = [{transform_indices = @transform_0, window_bounds = array<i64: 8, 32>}, {transform_indices = @transform_1, window_bounds = array<i64: 8, 32>}, {transform_indices = @transform_2, window_bounds = array<i64: 8, 32>}, {transform_indices = @transform_3, window_bounds = array<i64: 8, 32>}, {pipeline_mode = #tpu.pipeline_mode<synchronous>, transform_indices = @transform_4, window_bounds = array<i64: 1, 1>}]} {
    %c0 = arith.constant 0 : index
    %c0_0 = arith.constant 0 : index
    %0 = vector.load %arg2[%c0, %c0_0] : memref<8x32xf32, #tpu.memory_space<vmem>>, vector<8x32xf32>
    %c0_1 = arith.constant 0 : index
    %c0_2 = arith.constant 0 : index
    %1 = vector.load %arg3[%c0_1, %c0_2] : memref<8x32xf32, #tpu.memory_space<vmem>>, vector<8x32xf32>
    %c0_3 = arith.constant 0 : index
    %c0_4 = arith.constant 0 : index
    %2 = vector.load %arg4[%c0_3, %c0_4] : memref<8x32xf32, #tpu.memory_space<vmem>>, vector<8x32xf32>
    %c0_5 = arith.constant 0 : index
    %c0_6 = arith.constant 0 : index
    %3 = vector.load %arg5[%c0_5, %c0_6] : memref<8x32xf32, #tpu.memory_space<vmem>>, vector<8x32xf32>
    %4 = arith.mulf %0, %0 : vector<8x32xf32>
    %cst = arith.constant dense<0.000000e+00> : vector<8xf32>
    %5 = vector.multi_reduction <add>, %4, %cst [1] : vector<8x32xf32> to vector<8xf32>
    %6 = vector.shape_cast %5 : vector<8xf32> to vector<8x1xf32>
    %cst_7 = arith.constant 1.000000e-24 : f32
    %7 = vector.broadcast %cst_7 : f32 to vector<8x1xf32>
    %8 = arith.maximumf %6, %7 : vector<8x1xf32>
    %9 = math.rsqrt %8 : vector<8x1xf32>
    %10 = arith.mulf %1, %1 : vector<8x32xf32>
    %cst_8 = arith.constant dense<0.000000e+00> : vector<8xf32>
    %11 = vector.multi_reduction <add>, %10, %cst_8 [1] : vector<8x32xf32> to vector<8xf32>
    %12 = vector.shape_cast %11 : vector<8xf32> to vector<8x1xf32>
    %cst_9 = arith.constant 1.000000e-24 : f32
    %13 = vector.broadcast %cst_9 : f32 to vector<8x1xf32>
    %14 = arith.maximumf %12, %13 : vector<8x1xf32>
    %15 = math.rsqrt %14 : vector<8x1xf32>
    %16 = arith.mulf %2, %2 : vector<8x32xf32>
    %cst_10 = arith.constant dense<0.000000e+00> : vector<8xf32>
    %17 = vector.multi_reduction <add>, %16, %cst_10 [1] : vector<8x32xf32> to vector<8xf32>
    %18 = vector.shape_cast %17 : vector<8xf32> to vector<8x1xf32>
    %cst_11 = arith.constant 1.000000e-24 : f32
    %19 = vector.broadcast %cst_11 : f32 to vector<8x1xf32>
    %20 = arith.maximumf %18, %19 : vector<8x1xf32>
    %21 = math.rsqrt %20 : vector<8x1xf32>
    %22 = arith.mulf %3, %3 : vector<8x32xf32>
    %cst_12 = arith.constant dense<0.000000e+00> : vector<8xf32>
    %23 = vector.multi_reduction <add>, %22, %cst_12 [1] : vector<8x32xf32> to vector<8xf32>
    %24 = vector.shape_cast %23 : vector<8xf32> to vector<8x1xf32>
    %cst_13 = arith.constant 1.000000e-24 : f32
    %25 = vector.broadcast %cst_13 : f32 to vector<8x1xf32>
    %26 = arith.maximumf %24, %25 : vector<8x1xf32>
    %27 = math.rsqrt %26 : vector<8x1xf32>
    %cst_14 = arith.constant 2.000000e+00 : f32
    %28 = vector.broadcast %cst_14 : f32 to vector<8x1xf32>
    %29 = arith.mulf %9, %28 : vector<8x1xf32>
    %30 = vector.broadcast %29 : vector<8x1xf32> to vector<8x32xf32>
    %31 = arith.mulf %0, %30 : vector<8x32xf32>
    %cst_15 = arith.constant 2.000000e+00 : f32
    %32 = vector.broadcast %cst_15 : f32 to vector<8x1xf32>
    %33 = arith.mulf %15, %32 : vector<8x1xf32>
    %34 = vector.broadcast %33 : vector<8x1xf32> to vector<8x32xf32>
    %35 = arith.mulf %1, %34 : vector<8x32xf32>
    %36 = vector.broadcast %21 : vector<8x1xf32> to vector<8x32xf32>
    %37 = arith.mulf %2, %36 : vector<8x32xf32>
    %38 = vector.broadcast %27 : vector<8x1xf32> to vector<8x32xf32>
    %39 = arith.mulf %3, %38 : vector<8x32xf32>
    %40 = arith.truncf %31 : vector<8x32xf32> to vector<8x32xbf16>
    %41 = arith.truncf %35 : vector<8x32xf32> to vector<8x32xbf16>
    %42 = arith.truncf %37 : vector<8x32xf32> to vector<8x32xbf16>
    %43 = arith.truncf %39 : vector<8x32xf32> to vector<8x32xbf16>
    %cst_16 = arith.constant dense<0.000000e+00> : vector<8x8xf32>
    %44 = tpu.matmul %40, %42, %cst_16 {dimension_numbers = #tpu.dot_dimension_numbers<[1], [1], [0], [0], [0, 0, 1, 0], [], []>} : vector<8x32xbf16>, vector<8x32xbf16>, vector<8x8xf32> -> vector<8x8xf32>
    %45 = math.exp %44 : vector<8x8xf32>
    %cst_17 = arith.constant dense<0.000000e+00> : vector<8xf32>
    %46 = vector.multi_reduction <add>, %45, %cst_17 [1] : vector<8x8xf32> to vector<8xf32>
    %47 = vector.shape_cast %46 : vector<8xf32> to vector<8x1xf32>
    %cst_18 = arith.constant dense<0.000000e+00> : vector<8x8xf32>
    %48 = tpu.matmul %40, %43, %cst_18 {dimension_numbers = #tpu.dot_dimension_numbers<[1], [1], [0], [0], [0, 0, 1, 0], [], []>} : vector<8x32xbf16>, vector<8x32xbf16>, vector<8x8xf32> -> vector<8x8xf32>
    %49 = math.exp %48 : vector<8x8xf32>
    %cst_19 = arith.constant dense<0.000000e+00> : vector<8xf32>
    %50 = vector.multi_reduction <add>, %49, %cst_19 [1] : vector<8x8xf32> to vector<8xf32>
    %51 = vector.shape_cast %50 : vector<8xf32> to vector<8x1xf32>
    %52 = arith.addf %47, %51 : vector<8x1xf32>
    %cst_20 = arith.constant dense<0.000000e+00> : vector<8x8xf32>
    %53 = tpu.matmul %41, %42, %cst_20 {dimension_numbers = #tpu.dot_dimension_numbers<[1], [1], [0], [0], [0, 0, 1, 0], [], []>} : vector<8x32xbf16>, vector<8x32xbf16>, vector<8x8xf32> -> vector<8x8xf32>
    %54 = math.exp %53 : vector<8x8xf32>
    %cst_21 = arith.constant dense<0.000000e+00> : vector<8xf32>
    %55 = vector.multi_reduction <add>, %54, %cst_21 [1] : vector<8x8xf32> to vector<8xf32>
    %56 = vector.shape_cast %55 : vector<8xf32> to vector<8x1xf32>
    %cst_22 = arith.constant dense<0.000000e+00> : vector<8x8xf32>
    %57 = tpu.matmul %41, %43, %cst_22 {dimension_numbers = #tpu.dot_dimension_numbers<[1], [1], [0], [0], [0, 0, 1, 0], [], []>} : vector<8x32xbf16>, vector<8x32xbf16>, vector<8x8xf32> -> vector<8x8xf32>
    %58 = math.exp %57 : vector<8x8xf32>
    %cst_23 = arith.constant dense<0.000000e+00> : vector<8xf32>
    %59 = vector.multi_reduction <add>, %58, %cst_23 [1] : vector<8x8xf32> to vector<8xf32>
    %60 = vector.shape_cast %59 : vector<8xf32> to vector<8x1xf32>
    %61 = arith.addf %56, %60 : vector<8x1xf32>
    %c0_i32 = arith.constant 0 : i32
    %62 = arith.cmpi eq, %arg1, %c0_i32 : i32
    %63 = arith.extui %62 : i1 to i32
    %c0_i32_24 = arith.constant 0 : i32
    %64 = arith.cmpi ne, %63, %c0_i32_24 : i32
    scf.if %64 {
      %cst_38 = arith.constant 0.000000e+00 : f32
      %79 = vector.broadcast %cst_38 : f32 to vector<8x1xf32>
      %c0_39 = arith.constant 0 : index
      %c0_40 = arith.constant 0 : index
      %80 = vector.load %arg7[%c0_39, %c0_40] : memref<8x1xf32, #tpu.memory_space<vmem>>, vector<8x1xf32>
      tpu.vector_store %arg7[%c0_39, %c0_40], %79 {strides = array<i32>} : memref<8x1xf32, #tpu.memory_space<vmem>>, vector<8x1xf32>,
      %cst_41 = arith.constant 0.000000e+00 : f32
      %81 = vector.broadcast %cst_41 : f32 to vector<8x1xf32>
      %c0_42 = arith.constant 0 : index
      %c0_43 = arith.constant 0 : index
      %82 = vector.load %arg8[%c0_42, %c0_43] : memref<8x1xf32, #tpu.memory_space<vmem>>, vector<8x1xf32>
      tpu.vector_store %arg8[%c0_42, %c0_43], %81 {strides = array<i32>} : memref<8x1xf32, #tpu.memory_space<vmem>>, vector<8x1xf32>,
    } else {
    }
    %c0_25 = arith.constant 0 : index
    %c0_26 = arith.constant 0 : index
    %65 = vector.load %arg7[%c0_25, %c0_26] : memref<8x1xf32, #tpu.memory_space<vmem>>, vector<8x1xf32>
    %66 = arith.addf %65, %52 : vector<8x1xf32>
    %c0_27 = arith.constant 0 : index
    %c0_28 = arith.constant 0 : index
    %67 = vector.load %arg7[%c0_27, %c0_28] : memref<8x1xf32, #tpu.memory_space<vmem>>, vector<8x1xf32>
    tpu.vector_store %arg7[%c0_27, %c0_28], %66 {strides = array<i32>} : memref<8x1xf32, #tpu.memory_space<vmem>>, vector<8x1xf32>,
    %c0_29 = arith.constant 0 : index
    %c0_30 = arith.constant 0 : index
    %68 = vector.load %arg8[%c0_29, %c0_30] : memref<8x1xf32, #tpu.memory_space<vmem>>, vector<8x1xf32>
    %69 = arith.addf %68, %61 : vector<8x1xf32>
    %c0_31 = arith.constant 0 : index
    %c0_32 = arith.constant 0 : index
    %70 = vector.load %arg8[%c0_31, %c0_32] : memref<8x1xf32, #tpu.memory_space<vmem>>, vector<8x1xf32>
    tpu.vector_store %arg8[%c0_31, %c0_32], %69 {strides = array<i32>} : memref<8x1xf32, #tpu.memory_space<vmem>>, vector<8x1xf32>,
    %c0_i32_33 = arith.constant 0 : i32
    %71 = arith.cmpi eq, %arg0, %c0_i32_33 : i32
    %c0_i32_34 = arith.constant 0 : i32
    %72 = arith.cmpi eq, %arg1, %c0_i32_34 : i32
    %73 = arith.andi %71, %72 : i1
    %74 = arith.extui %73 : i1 to i32
    %c0_i32_35 = arith.constant 0 : i32
    %75 = arith.cmpi ne, %74, %c0_i32_35 : i32
    scf.if %75 {
      %cst_38 = arith.constant 0.000000e+00 : f32
      %79 = vector.broadcast %cst_38 : f32 to vector<1x1xf32>
      %c0_39 = arith.constant 0 : index
      %c0_40 = arith.constant 0 : index
      %80 = vector.load %arg6[%c0_39, %c0_40] : memref<1x1xf32, #tpu.memory_space<vmem>>, vector<1x1xf32>
      tpu.vector_store %arg6[%c0_39, %c0_40], %79 {strides = array<i32>} : memref<1x1xf32, #tpu.memory_space<vmem>>, vector<1x1xf32>,
    } else {
    }
    %c0_i32_36 = arith.constant 0 : i32
    %76 = arith.cmpi eq, %arg1, %c0_i32_36 : i32
    %77 = arith.extui %76 : i1 to i32
    %c0_i32_37 = arith.constant 0 : i32
    %78 = arith.cmpi ne, %77, %c0_i32_37 : i32
    scf.if %78 {
      %79 = arith.mulf %9, %9 : vector<8x1xf32>
      %80 = arith.mulf %6, %79 : vector<8x1xf32>
      %cst_38 = arith.constant 2.000000e+00 : f32
      %81 = vector.broadcast %cst_38 : f32 to vector<8x1xf32>
      %82 = arith.mulf %80, %81 : vector<8x1xf32>
      %83 = math.exp %82 : vector<8x1xf32>
      %84 = arith.mulf %15, %15 : vector<8x1xf32>
      %85 = arith.mulf %12, %84 : vector<8x1xf32>
      %cst_39 = arith.constant 2.000000e+00 : f32
      %86 = vector.broadcast %cst_39 : f32 to vector<8x1xf32>
      %87 = arith.mulf %85, %86 : vector<8x1xf32>
      %88 = math.exp %87 : vector<8x1xf32>
      %c0_40 = arith.constant 0 : index
      %c0_41 = arith.constant 0 : index
      %89 = vector.load %arg7[%c0_40, %c0_41] : memref<8x1xf32, #tpu.memory_space<vmem>>, vector<8x1xf32>
      %90 = arith.subf %89, %83 : vector<8x1xf32>
      %c0_42 = arith.constant 0 : index
      %c0_43 = arith.constant 0 : index
      %91 = vector.load %arg8[%c0_42, %c0_43] : memref<8x1xf32, #tpu.memory_space<vmem>>, vector<8x1xf32>
      %92 = arith.subf %91, %88 : vector<8x1xf32>
      %93 = arith.mulf %0, %1 : vector<8x32xf32>
      %cst_44 = arith.constant dense<0.000000e+00> : vector<8xf32>
      %94 = vector.multi_reduction <add>, %93, %cst_44 [1] : vector<8x32xf32> to vector<8xf32>
      %95 = vector.shape_cast %94 : vector<8xf32> to vector<8x1xf32>
      %96 = arith.mulf %9, %15 : vector<8x1xf32>
      %cst_45 = arith.constant 2.000000e+00 : f32
      %97 = vector.broadcast %cst_45 : f32 to vector<8x1xf32>
      %98 = arith.mulf %96, %97 : vector<8x1xf32>
      %99 = arith.mulf %95, %98 : vector<8x1xf32>
      %100 = math.log %90 : vector<8x1xf32>
      %101 = arith.subf %100, %99 : vector<8x1xf32>
      %102 = math.log %92 : vector<8x1xf32>
      %103 = arith.subf %102, %99 : vector<8x1xf32>
      %104 = arith.addf %101, %103 : vector<8x1xf32>
      %c0_46 = arith.constant 0 : index
      %c0_47 = arith.constant 0 : index
      %105 = vector.load %arg6[%c0_46, %c0_47] : memref<1x1xf32, #tpu.memory_space<vmem>>, vector<1x1xf32>
      %cst_48 = arith.constant dense<0.000000e+00> : vector<1xf32>
      %106 = vector.multi_reduction <add>, %104, %cst_48 [0] : vector<8x1xf32> to vector<1xf32>
      %107 = vector.shape_cast %106 : vector<1xf32> to vector<1x1xf32>
      %cst_49 = arith.constant 6.250000e-02 : f32
      %108 = vector.broadcast %cst_49 : f32 to vector<1x1xf32>
      %109 = arith.mulf %107, %108 : vector<1x1xf32>
      %110 = arith.addf %105, %109 : vector<1x1xf32>
      %c0_50 = arith.constant 0 : index
      %c0_51 = arith.constant 0 : index
      %111 = vector.load %arg6[%c0_50, %c0_51] : memref<1x1xf32, #tpu.memory_space<vmem>>, vector<1x1xf32>
      tpu.vector_store %arg6[%c0_50, %c0_51], %110 {strides = array<i32>} : memref<1x1xf32, #tpu.memory_space<vmem>>, vector<1x1xf32>,
    } else {
    }
    return
  }
  func.func @transform_0(%arg0: i32, %arg1: i32) -> (i32, i32) {
    %c0_i32 = arith.constant 0 : i32
    %c0_i32_0 = arith.constant 0 : i32
    return %arg0, %c0_i32 : i32, i32
  }
  func.func @transform_1(%arg0: i32, %arg1: i32) -> (i32, i32) {
    %c0_i32 = arith.constant 0 : i32
    %c0_i32_0 = arith.constant 0 : i32
    return %arg0, %c0_i32 : i32, i32
  }
  func.func @transform_2(%arg0: i32, %arg1: i32) -> (i32, i32) {
    %c0_i32 = arith.constant 0 : i32
    %c0_i32_0 = arith.constant 0 : i32
    return %arg1, %c0_i32 : i32, i32
  }
  func.func @transform_3(%arg0: i32, %arg1: i32) -> (i32, i32) {
    %c0_i32 = arith.constant 0 : i32
    %c0_i32_0 = arith.constant 0 : i32
    return %arg1, %c0_i32 : i32, i32
  }
  func.func @transform_4(%arg0: i32, %arg1: i32) -> (i32, i32) {
    %c0_i32 = arith.constant 0 : i32
    %c0_i32_0 = arith.constant 0 : i32
    %c0_i32_1 = arith.constant 0 : i32
    return %c0_i32, %c0_i32_0 : i32, i32
  }
}

</mosaic_0001>

<llo_original>
// kernel: tpu_custom_call.1
$region0: #{tpu_custom_call.1}
  #allocation0 [shape = 'u32[]', space=smem, size = 0x4, offset = 0x4, fixed_abs, tag = 'smem constant byte address 0x4 - core index']
  #allocation1 [shape = 'u32[144,128]{1,0:T(1,128)}', space=vmem, size = 0x12000, scoped, tag = 'internal scratch']
  #allocation2 [shape = 'f32[8,1]{1,0:T(8,128)}', space=vmem, size = 0x1000, scoped, tag = 'scratch operand']
  #allocation3 [shape = 'f32[8,1]{1,0:T(8,128)}', space=vmem, size = 0x1000, scoped, tag = 'scratch operand']
  %s0 = inlined_call_operand.hbm [shape: f32[8,32], index: 0, kind: input, shape index: {}]
  %s1 = inlined_call_operand.hbm [shape: f32[8,32], index: 1, kind: input, shape index: {}]
  %s2 = inlined_call_operand.hbm [shape: f32[8,32], index: 2, kind: input, shape index: {}]
  %s3 = inlined_call_operand.vmem [shape: f32[8,32], index: 3, kind: input, shape index: {}]
  %s4 = inlined_call_operand.hbm [shape: f32[1,1], index: 4, kind: output, shape index: {}]
  %s5 = sld [smem:[#allocation0]]
  $region50: #{tpu_custom_call.1} parent=0
    _
  %s7 = ssub.s32 1, %s5
  %s8 = scalar_select 0, %s7, %s5
  $region1: #{tpu_custom_call.1} parent=0
    #allocation4 [shape = 'u8[4096]{0}', space=vmem, size = 0x1000, scoped, tag = 'input window, operand 0, single buffered']
    #allocation5 [shape = 's32[1]{0}', space=sflag, size = 0x4, scoped, tag = 'scoped memory for tpu_custom_call.1']
    #allocation6 [shape = 's32[1]{0}', space=sflag, size = 0x4, scoped, tag = 'scoped memory for tpu_custom_call.1']
    #allocation7 [shape = 'u8[4096]{0}', space=vmem, size = 0x1000, scoped, tag = 'input window, operand 1, single buffered']
    #allocation8 [shape = 's32[1]{0}', space=sflag, size = 0x4, scoped, tag = 'scoped memory for tpu_custom_call.1']
    #allocation9 [shape = 'u8[4096]{0}', space=vmem, size = 0x1000, scoped, tag = 'input window, operand 2, single buffered']
    #allocation10 [shape = 'u8[512]{0}', space=vmem, size = 0x400, scoped, tag = 'output window, operand 0, single buffered']
    %9 = vsyncpa [#allocation5], 0
    %10 = vsyncpa [#allocation8], 0
    %11 = vsyncpa [#allocation6], 0
    // Predicated region
    $region2: #{tpu_custom_call.1} parent=1 // pred_check
      _
    $region3: #{tpu_custom_call.1} parent=1 // pred_check_branch
      %13 = sbr.rel (0) target = $region5
    $region4: #{tpu_custom_call.1} parent=1 // pred_region
      %s15 = ssub.s32 128, 128
      %16 = vsyncadd [#allocation5], %s15
      %s18 = sshll.u32 [#allocation4], 4
      %s19 = int_to_ptr.vmem [resolvable:$true] %s18
      %21 = dma.hbm_to_vmem [thread:$0]  %s0, 128, %s19, [#allocation5]
    $region5: #{tpu_custom_call.1} parent=1 // pred_fallthru
      _
    // Predicated region
    $region6: #{tpu_custom_call.1} parent=1 // pred_check
      _
    $region7: #{tpu_custom_call.1} parent=1 // pred_check_branch
      %23 = sbr.rel (0) target = $region9
    $region8: #{tpu_custom_call.1} parent=1 // pred_region
      %s25 = ssub.s32 128, 128
      %26 = vsyncadd [#allocation8], %s25
      %s28 = sshll.u32 [#allocation7], 4
      %s29 = int_to_ptr.vmem [resolvable:$true] %s28
      %31 = dma.hbm_to_vmem [thread:$0]  %s1, 128, %s29, [#allocation8]
    $region9: #{tpu_custom_call.1} parent=1 // pred_fallthru
      _
    // Predicated region
    $region10: #{tpu_custom_call.1} parent=1 // pred_check
      _
    $region11: #{tpu_custom_call.1} parent=1 // pred_check_branch
      %33 = sbr.rel (0) target = $region13
    $region12: #{tpu_custom_call.1} parent=1 // pred_region
      %s35 = ssub.s32 128, 128
      %36 = vsyncadd [#allocation8], %s35
      %s38 = sshll.u32 [#allocation9], 4
      %s39 = int_to_ptr.vmem [resolvable:$true] %s38
      %41 = dma.hbm_to_vmem [thread:$0]  %s2, 128, %s39, [#allocation8]
    $region13: #{tpu_custom_call.1} parent=1 // pred_fallthru
      _
    // Predicated region
    $region14: #{tpu_custom_call.1} parent=1 // pred_check
      _
    $region15: #{tpu_custom_call.1} parent=1 // pred_check_branch
      %43 = sbr.rel (0) target = $region17
    $region16: #{tpu_custom_call.1} parent=1 // pred_region
      _
    $region17: #{tpu_custom_call.1} parent=1 // pred_fallthru
      _
    // Predicated region
    $region18: #{tpu_custom_call.1} parent=1 // pred_check
      _
    $region19: #{tpu_custom_call.1} parent=1 // pred_check_branch
      %45 = sbr.rel (0) target = $region21
    $region20: #{tpu_custom_call.1} parent=1 // pred_region
      %46 = dma.done [#allocation5], 128
    $region21: #{tpu_custom_call.1} parent=1 // pred_fallthru
      _
    // Predicated region
    $region22: #{tpu_custom_call.1} parent=1 // pred_check
      _
    $region23: #{tpu_custom_call.1} parent=1 // pred_check_branch
      %48 = sbr.rel (0) target = $region25
    $region24: #{tpu_custom_call.1} parent=1 // pred_region
      %49 = dma.done [#allocation8], 128
    $region25: #{tpu_custom_call.1} parent=1 // pred_fallthru
      _
    // Predicated region
    $region26: #{tpu_custom_call.1} parent=1 // pred_check
      _
    $region27: #{tpu_custom_call.1} parent=1 // pred_check_branch
      %51 = sbr.rel (0) target = $region29
    $region28: #{tpu_custom_call.1} parent=1 // pred_region
      %52 = dma.done [#allocation8], 128
    $region29: #{tpu_custom_call.1} parent=1 // pred_fallthru
      _
    %v54 = vld [vmem:[#allocation4] sm:$0xff]
    %v55 = vld [vmem:[#allocation7] sm:$0xff]
    %v56 = vld [vmem:[#allocation9] sm:$0xff]
    %v57 = vld [vmem:[%s3] sm:$0xff]
    %v58 = vmul.f32 %v54, %v54
    %vm59 = vcmask 261120
    %v60 = vsel %vm59, %v58, 0.0
    %61 = vadd.xlane.f32.xlu0 %v60
    %v62 = vpop.xlane.xlu0 %61
    %v63 = vmax.f32 %v62, 1e-24
    %v64 = vrsqrt.pop %v63
    %v65 = vmul.f32 %v55, %v55
    %v66 = vsel %vm59, %v65, 0.0
    %67 = vadd.xlane.f32.xlu0 %v66
    %v68 = vpop.xlane.xlu0 %67
    %v69 = vmax.f32 %v68, 1e-24
    %v70 = vrsqrt.pop %v69
    %v71 = vmul.f32 %v56, %v56
    %v72 = vsel %vm59, %v71, 0.0
    %73 = vadd.xlane.f32.xlu0 %v72
    %v74 = vpop.xlane.xlu0 %73
    %v75 = vmax.f32 %v74, 1e-24
    %v76 = vrsqrt.pop %v75
    %v77 = vmul.f32 %v57, %v57
    %v78 = vsel %vm59, %v77, 0.0
    %79 = vadd.xlane.f32.xlu0 %v78
    %v80 = vpop.xlane.xlu0 %79
    %v81 = vmax.f32 %v80, 1e-24
    %v82 = vrsqrt.pop %v81
    %v83 = vmul.f32 %v64, 2.0
    %v84 = vmul.f32 %v54, %v83
    %v85 = vmul.f32 %v70, 2.0
    %v86 = vmul.f32 %v55, %v85
    %v87 = vmul.f32 %v56, %v76
    %v88 = vmul.f32 %v57, %v82
    %v89 = vpack.c.bf16 %v84, %v84
    %v90 = vpack.c.bf16 %v86, %v86
    %v91 = vpack.c.bf16 %v87, %v87
    %v92 = vpack.c.bf16 %v88, %v88
    %v94 = vsel %vm59, %v89, 0
    %v97 = vsel %vm59, %v91, 0
    %99 = vmatprep.subr.bf16.mxu0 0
    %100 = vmatpush1.bf16.xpose.msra.mxu0 %v97
    %101 = vmatprep.subr.bf16.mxu0 0
    %102 = vmatpush1.bf16.xpose.msra.mxu0 0
    %103 = vmatprep.subr.bf16.mxu0 0
    %104 = vmatpush1.bf16.xpose.msra.mxu0 0
    %105 = vmatprep.subr.bf16.mxu0 0
    %106 = vmatpush1.bf16.xpose.msra.mxu0 0
    %107 = vmatprep.subr.bf16.mxu0 0
    %108 = vmatpush1.bf16.xpose.msra.mxu0 0
    %109 = vmatprep.subr.bf16.mxu0 0
    %110 = vmatpush1.bf16.xpose.msra.mxu0 0
    %111 = vmatprep.subr.bf16.mxu0 0
    %112 = vmatpush1.bf16.xpose.msra.mxu0 0
    %113 = vmatprep.subr.bf16.mxu0 0
    %114 = vmatpush1.bf16.xpose.msra.mxu0 0
    %115 = vmatprep.subr.bf16.mxu0 0
    %116 = vmatpush1.bf16.xpose.msra.mxu0 0
    %117 = vmatprep.subr.bf16.mxu0 0
    %118 = vmatpush1.bf16.xpose.msra.mxu0 0
    %119 = vmatprep.subr.bf16.mxu0 0
    %120 = vmatpush1.bf16.xpose.msra.mxu0 0
    %121 = vmatprep.subr.bf16.mxu0 0
    %122 = vmatpush1.bf16.xpose.msra.mxu0 0
    %123 = vmatprep.subr.bf16.mxu0 0
    %124 = vmatpush1.bf16.xpose.msra.mxu0 0
    %125 = vmatprep.subr.bf16.mxu0 0
    %126 = vmatpush1.bf16.xpose.msra.mxu0 0
    %127 = vmatprep.subr.bf16.mxu0 0
    %128 = vmatpush1.bf16.xpose.msra.mxu0 0
    %129 = vmatprep.subr.bf16.mxu0 0
    %130 = vmatpush1.bf16.xpose.msra.mxu0 0
    %131 = vmatprep.mubr.bf16.mxu0 0
    %132 = vmatmul.mubr.bf16.gmra.mrb[0].mxu0 %v94
    %v133 = vpop.f32.mrb[0].mxu0
    %v134 = vadd.f32 0.0, %v133
    %v135 = vpop.f32.mrb[0].mxu0
    %v136 = vpop.f32.mrb[0].mxu0
    %v137 = vpop.f32.mrb[0].mxu0
    %138 = vdwg.mxu0
    %v139 = vmul.f32 %v134, 1.442695
    %v140 = vpow.pop %v139
    %vm141 = vcmask 64512
    %v142 = vsel %vm141, %v140, 0.0
    %143 = vadd.xlane.f32.xlu0 %v142
    %v144 = vpop.xlane.xlu0 %143
    %v146 = vsel %vm59, %v92, 0
    %148 = vmatprep.subr.bf16.mxu0 0
    %149 = vmatpush1.bf16.xpose.msra.mxu0 %v146
    %150 = vmatprep.subr.bf16.mxu0 0
    %151 = vmatpush1.bf16.xpose.msra.mxu0 0
    %152 = vmatprep.subr.bf16.mxu0 0
    %153 = vmatpush1.bf16.xpose.msra.mxu0 0
    %154 = vmatprep.subr.bf16.mxu0 0
    %155 = vmatpush1.bf16.xpose.msra.mxu0 0
    %156 = vmatprep.subr.bf16.mxu0 0
    %157 = vmatpush1.bf16.xpose.msra.mxu0 0
    %158 = vmatprep.subr.bf16.mxu0 0
    %159 = vmatpush1.bf16.xpose.msra.mxu0 0
    %160 = vmatprep.subr.bf16.mxu0 0
    %161 = vmatpush1.bf16.xpose.msra.mxu0 0
    %162 = vmatprep.subr.bf16.mxu0 0
    %163 = vmatpush1.bf16.xpose.msra.mxu0 0
    %164 = vmatprep.subr.bf16.mxu0 0
    %165 = vmatpush1.bf16.xpose.msra.mxu0 0
    %166 = vmatprep.subr.bf16.mxu0 0
    %167 = vmatpush1.bf16.xpose.msra.mxu0 0
    %168 = vmatprep.subr.bf16.mxu0 0
    %169 = vmatpush1.bf16.xpose.msra.mxu0 0
    %170 = vmatprep.subr.bf16.mxu0 0
    %171 = vmatpush1.bf16.xpose.msra.mxu0 0
    %172 = vmatprep.subr.bf16.mxu0 0
    %173 = vmatpush1.bf16.xpose.msra.mxu0 0
    %174 = vmatprep.subr.bf16.mxu0 0
    %175 = vmatpush1.bf16.xpose.msra.mxu0 0
    %176 = vmatprep.subr.bf16.mxu0 0
    %177 = vmatpush1.bf16.xpose.msra.mxu0 0
    %178 = vmatprep.subr.bf16.mxu0 0
    %179 = vmatpush1.bf16.xpose.msra.mxu0 0
    %180 = vmatprep.mubr.bf16.mxu0 0
    %181 = vmatmul.mubr.bf16.gmra.mrb[0].mxu0 %v94
    %v182 = vpop.f32.mrb[0].mxu0
    %v183 = vadd.f32 0.0, %v182
    %v184 = vpop.f32.mrb[0].mxu0
    %v185 = vpop.f32.mrb[0].mxu0
    %v186 = vpop.f32.mrb[0].mxu0
    %187 = vdwg.mxu0
    %v188 = vmul.f32 %v183, 1.442695
    %v189 = vpow.pop %v188
    %v190 = vsel %vm141, %v189, 0.0
    %191 = vadd.xlane.f32.xlu0 %v190
    %v192 = vpop.xlane.xlu0 %191
    %v193 = vadd.f32 %v144, %v192
    %v195 = vsel %vm59, %v90, 0
    %197 = vmatprep.subr.bf16.mxu0 0
    %198 = vmatpush1.bf16.xpose.msra.mxu0 %v97
    %199 = vmatprep.subr.bf16.mxu0 0
    %200 = vmatpush1.bf16.xpose.msra.mxu0 0
    %201 = vmatprep.subr.bf16.mxu0 0
    %202 = vmatpush1.bf16.xpose.msra.mxu0 0
    %203 = vmatprep.subr.bf16.mxu0 0
    %204 = vmatpush1.bf16.xpose.msra.mxu0 0
    %205 = vmatprep.subr.bf16.mxu0 0
    %206 = vmatpush1.bf16.xpose.msra.mxu0 0
    %207 = vmatprep.subr.bf16.mxu0 0
    %208 = vmatpush1.bf16.xpose.msra.mxu0 0
    %209 = vmatprep.subr.bf16.mxu0 0
    %210 = vmatpush1.bf16.xpose.msra.mxu0 0
    %211 = vmatprep.subr.bf16.mxu0 0
    %212 = vmatpush1.bf16.xpose.msra.mxu0 0
    %213 = vmatprep.subr.bf16.mxu0 0
    %214 = vmatpush1.bf16.xpose.msra.mxu0 0
    %215 = vmatprep.subr.bf16.mxu0 0
    %216 = vmatpush1.bf16.xpose.msra.mxu0 0
    %217 = vmatprep.subr.bf16.mxu0 0
    %218 = vmatpush1.bf16.xpose.msra.mxu0 0
    %219 = vmatprep.subr.bf16.mxu0 0
    %220 = vmatpush1.bf16.xpose.msra.mxu0 0
    %221 = vmatprep.subr.bf16.mxu0 0
    %222 = vmatpush1.bf16.xpose.msra.mxu0 0
    %223 = vmatprep.subr.bf16.mxu0 0
    %224 = vmatpush1.bf16.xpose.msra.mxu0 0
    %225 = vmatprep.subr.bf16.mxu0 0
    %226 = vmatpush1.bf16.xpose.msra.mxu0 0
    %227 = vmatprep.subr.bf16.mxu0 0
    %228 = vmatpush1.bf16.xpose.msra.mxu0 0
    %229 = vmatprep.mubr.bf16.mxu0 0
    %230 = vmatmul.mubr.bf16.gmra.mrb[0].mxu0 %v195
    %v231 = vpop.f32.mrb[0].mxu0
    %v232 = vadd.f32 0.0, %v231
    %v233 = vpop.f32.mrb[0].mxu0
    %v234 = vpop.f32.mrb[0].mxu0
    %v235 = vpop.f32.mrb[0].mxu0
    %236 = vdwg.mxu0
    %v237 = vmul.f32 %v232, 1.442695
    %v238 = vpow.pop %v237
    %v239 = vsel %vm141, %v238, 0.0
    %240 = vadd.xlane.f32.xlu0 %v239
    %v241 = vpop.xlane.xlu0 %240
    %242 = vmatprep.subr.bf16.mxu0 0
    %243 = vmatpush1.bf16.xpose.msra.mxu0 %v146
    %244 = vmatprep.subr.bf16.mxu0 0
    %245 = vmatpush1.bf16.xpose.msra.mxu0 0
    %246 = vmatprep.subr.bf16.mxu0 0
    %247 = vmatpush1.bf16.xpose.msra.mxu0 0
    %248 = vmatprep.subr.bf16.mxu0 0
    %249 = vmatpush1.bf16.xpose.msra.mxu0 0
    %250 = vmatprep.subr.bf16.mxu0 0
    %251 = vmatpush1.bf16.xpose.msra.mxu0 0
    %252 = vmatprep.subr.bf16.mxu0 0
    %253 = vmatpush1.bf16.xpose.msra.mxu0 0
    %254 = vmatprep.subr.bf16.mxu0 0
    %255 = vmatpush1.bf16.xpose.msra.mxu0 0
    %256 = vmatprep.subr.bf16.mxu0 0
    %257 = vmatpush1.bf16.xpose.msra.mxu0 0
    %258 = vmatprep.subr.bf16.mxu0 0
    %259 = vmatpush1.bf16.xpose.msra.mxu0 0
    %260 = vmatprep.subr.bf16.mxu0 0
    %261 = vmatpush1.bf16.xpose.msra.mxu0 0
    %262 = vmatprep.subr.bf16.mxu0 0
    %263 = vmatpush1.bf16.xpose.msra.mxu0 0
    %264 = vmatprep.subr.bf16.mxu0 0
    %265 = vmatpush1.bf16.xpose.msra.mxu0 0
    %266 = vmatprep.subr.bf16.mxu0 0
    %267 = vmatpush1.bf16.xpose.msra.mxu0 0
    %268 = vmatprep.subr.bf16.mxu0 0
    %269 = vmatpush1.bf16.xpose.msra.mxu0 0
    %270 = vmatprep.subr.bf16.mxu0 0
    %271 = vmatpush1.bf16.xpose.msra.mxu0 0
    %272 = vmatprep.subr.bf16.mxu0 0
    %273 = vmatpush1.bf16.xpose.msra.mxu0 0
    %274 = vmatprep.mubr.bf16.mxu0 0
    %275 = vmatmul.mubr.bf16.gmra.mrb[0].mxu0 %v195
    %v276 = vpop.f32.mrb[0].mxu0
    %v277 = vadd.f32 0.0, %v276
    %v278 = vpop.f32.mrb[0].mxu0
    %v279 = vpop.f32.mrb[0].mxu0
    %v280 = vpop.f32.mrb[0].mxu0
    %281 = vdwg.mxu0
    %v282 = vmul.f32 %v277, 1.442695
    %v283 = vpow.pop %v282
    %v284 = vsel %vm141, %v283, 0.0
    %285 = vadd.xlane.f32.xlu0 %v284
    %v286 = vpop.xlane.xlu0 %285
    %v287 = vadd.f32 %v241, %v286
    %p288 = scmp.eq.s32.totalorder 0, 0
    // Predicated region
    $region30: #{tpu_custom_call.1} parent=1 // pred_check
      %p289 = pneg %p288
    $region31: #{tpu_custom_call.1} parent=1 // pred_check_branch
      %291 = sbr.rel (%p289) target = $region33
    $region32: #{tpu_custom_call.1} parent=1 // pred_region
      %vm292 = vcmask 7168
      %293 = vst.msk [vmem:[#allocation2] sm:$0xff] %vm292, 0.0
      %294 = vst.msk [vmem:[#allocation3] sm:$0xff] %vm292, 0.0
    $region33: #{tpu_custom_call.1} parent=1 // pred_fallthru
      _
    %v295 = vld [vmem:[#allocation2] sm:$0xff]
    %v296 = vadd.f32 %v295, %v193
    %vm297 = vcmask 7168
    %298 = vst.msk [vmem:[#allocation2] sm:$0xff] %vm297, %v296
    %v299 = vld [vmem:[#allocation3] sm:$0xff]
    %v300 = vadd.f32 %v299, %v287
    %301 = vst.msk [vmem:[#allocation3] sm:$0xff] %vm297, %v300
    %p302 = scmp.eq.s32.totalorder 0, 0
    %p303 = pnand %p302, %p288
    %p304 = pneg %p303
    // Predicated region
    $region34: #{tpu_custom_call.1} parent=1 // pred_check
      _
    $region35: #{tpu_custom_call.1} parent=1 // pred_check_branch
      %306 = sbr.rel (%p303) target = $region37
    $region36: #{tpu_custom_call.1} parent=1 // pred_region
      %vm307 = vcmask 0
      %308 = vst.msk [vmem:[#allocation10] sm:$0x1] %vm307, 0.0
    $region37: #{tpu_custom_call.1} parent=1 // pred_fallthru
      _
    // Predicated region
    $region38: #{tpu_custom_call.1} parent=1 // pred_check
      %p309 = pneg %p288
    $region39: #{tpu_custom_call.1} parent=1 // pred_check_branch
      %311 = sbr.rel (%p309) target = $region41
    $region40: #{tpu_custom_call.1} parent=1 // pred_region
      %v312 = vmul.f32 %v64, %v64
      %v313 = vmul.f32 %v62, %v312
      %v314 = vmul.f32 %v313, 2.0
      %v315 = vmul.f32 %v314, 1.442695
      %v316 = vpow.pop %v315
      %v317 = vmul.f32 %v70, %v70
      %v318 = vmul.f32 %v68, %v317
      %v319 = vmul.f32 %v318, 2.0
      %v320 = vmul.f32 %v319, 1.442695
      %v321 = vpow.pop %v320
      %v322 = vld [vmem:[#allocation2] sm:$0xff]
      %v323 = vsub.f32 %v322, %v316
      %v324 = vld [vmem:[#allocation3] sm:$0xff]
      %v325 = vsub.f32 %v324, %v321
      %v326 = vmul.f32 %v54, %v55
      %v327 = vsel %vm59, %v326, 0.0
      %328 = vadd.xlane.f32.xlu0 %v327
      %v329 = vpop.xlane.xlu0 %328
      %v330 = vmul.f32 %v64, %v70
      %v331 = vmul.f32 %v330, 2.0
      %v332 = vmul.f32 %v329, %v331
      %v333 = vlog2.pop %v323
      %v334 = vmul.f32 %v333, 0.6931472
      %v335 = vsub.f32 %v334, %v332
      %v336 = vlog2.pop %v325
      %v337 = vmul.f32 %v336, 0.6931472
      %v338 = vsub.f32 %v337, %v332
      %v339 = vadd.f32 %v335, %v338
      %v340 = vld [vmem:[#allocation10] sm:$0x1]
      %v341 = vsel %vm297, %v339, 0.0
      %v342 = vrot.slane %v341, 4
      %v343 = vadd.f32 %v341, %v342
      %v344 = vrot.slane %v343, 2
      %v345 = vadd.f32 %v343, %v344
      %v346 = vrot.slane %v345, 1
      %v347 = vadd.f32 %v345, %v346
      %v348 = vmul.f32 %v347, 0.0625
      %v349 = vadd.f32 %v340, %v348
      %vm350 = vcmask 0
      %351 = vst.msk [vmem:[#allocation10] sm:$0x1] %vm350, %v349
    $region41: #{tpu_custom_call.1} parent=1 // pred_fallthru
      _
    // Predicated region
    $region42: #{tpu_custom_call.1} parent=1 // pred_check
      _
    $region43: #{tpu_custom_call.1} parent=1 // pred_check_branch
      %353 = sbr.rel (0) target = $region45
    $region44: #{tpu_custom_call.1} parent=1 // pred_region
      %s355 = ssub.s32 16, 16
      %356 = vsyncadd [#allocation6], %s355
      %s358 = sshll.u32 [#allocation10], 4
      %s359 = int_to_ptr.vmem [resolvable:$true] %s358
      %361 = dma.vmem_to_hbm [thread:$0]  %s359, 16, %s4, [#allocation6]
    $region45: #{tpu_custom_call.1} parent=1 // pred_fallthru
      _
    // Predicated region
    $region46: #{tpu_custom_call.1} parent=1 // pred_check
      _
    $region47: #{tpu_custom_call.1} parent=1 // pred_check_branch
      %363 = sbr.rel (0) target = $region49
    $region48: #{tpu_custom_call.1} parent=1 // pred_region
      %364 = dma.done [#allocation6], 16
    $region49: #{tpu_custom_call.1} parent=1 // pred_fallthru
      _
    %365 = vsyncpa [#allocation5], 1
    %366 = vsyncpa [#allocation8], 1
    %367 = vsyncpa [#allocation6], 1

</llo_original>
